<compile_context>
chip_gen: v5e
topology: v5e:2x2
jax: 0.10.0
libtpu: 0.0.40
codegen_flags: <defaults>
</compile_context>

<pallas_src>
import functools

import jax
import jax.numpy as jnp
from jax.experimental import pallas as pl
from jax.experimental.pallas import tpu as pltpu

_EPS = 1e-5


def _relu_conv3x3_flat(x_ref, w_ref, *, H, W):
    """ReLU + 3x3 same-padding conv on one (1, C_in, H*W) block.

    x_ref: (1, C_in, H*W) block.
    w_ref: (C_out, 9*C_in) im2col-ordered weights; column layout is
           (kh*3 + kw) * C_in + c_in (tap-major, matching the window stack).
    Returns the conv output as a (C_out, H*W) float32 array.
    """
    HW = H * W
    c_in = x_ref.shape[1]

    xr = jnp.maximum(x_ref[0], 0).astype(jnp.float32)            # ReLU, (C_in, HW)
    # TODO(synk): feed the MXU bf16 operands (cast xr/w2 to bf16, keep f32
    # accumulation) when the surrounding model runs bf16; kept f32 to match the
    # f32 PyTorch module and the 1e-4 tolerance.

    # Only two boundary masks are needed: a copy with column W-1 zeroed feeds
    # every ow=-1 tap (kills the row wrap-around reads, including the corner
    # wraps), and a copy with column 0 zeroed feeds every ow=+1 tap.
    col = jax.lax.broadcasted_iota(jnp.int32, (1, HW), 1) % W
    x_l = jnp.where(col != (W - 1), xr, 0.0)                     # for ow = -1 taps
    x_r = jnp.where(col != 0, xr, 0.0)                           # for ow = +1 taps

    # Zero-pad the flattened spatial axis by W+1 on each side so every tap
    # offset oh*W + ow (oh, ow in {-1,0,1}) is a static in-bounds slice; the
    # padding supplies the zeros for the top/bottom image rows.
    zpad = jnp.zeros((c_in, W + 1), jnp.float32)
    xp = {
        -1: jnp.concatenate([zpad, x_l, zpad], axis=1),
        0: jnp.concatenate([zpad, xr, zpad], axis=1),
        1: jnp.concatenate([zpad, x_r, zpad], axis=1),
    }

    # im2col: stack the 9 shifted windows along the contraction axis and do a
    # single MXU matmul with K = 9*C_in.
    wins = []
    for k in range(9):                    # k = kh*3 + kw
        oh = k // 3 - 1
        ow = k % 3 - 1
        off = oh * W + ow + (W + 1)       # static offset into the padded copy
        wins.append(xp[ow][:, off:off + HW])
    col_buf = jnp.concatenate(wins, axis=0)                      # (9*C_in, HW)

    return jnp.dot(w_ref[...], col_buf, preferred_element_type=jnp.float32)


def _conv_stats_kernel(x_ref, w_ref, stats_ref, *, H, W):
    """Per-block per-channel partials: row 0 = sum, row 1 = centered sum-sq."""
    conv = _relu_conv3x3_flat(x_ref, w_ref, H=H, W=W)            # (C, HW) f32
    s = jnp.sum(conv, axis=-1, keepdims=True)                    # (C, 1)
    d = conv - s * (1.0 / (H * W))                               # center on block mean
    m2 = jnp.sum(d * d, axis=-1, keepdims=True)                  # (C, 1)
    stats_ref[0] = jnp.concatenate([s, m2], axis=1).T            # lane-dense (2, C)


def _conv_bn_kernel(x_ref, w_ref, b_ref, o_ref, *, H, W):
    # BN scale is folded into w_ref outside the kernel; only the shift remains.
    conv = _relu_conv3x3_flat(x_ref, w_ref, H=H, W=W)            # (C, HW) f32
    o_ref[0] = (conv + b_ref[...]).astype(o_ref.dtype)


def _vmem_limit_bytes():
    # Per-generation budget: ~half of physical VMEM (64 MiB on v5e/v6e,
    # 32 MiB on v7x, which only has 64 MiB per TensorCore).
    try:
        cap = pltpu.get_tpu_info().vmem_capacity_bytes
    except Exception:
        cap = 64 * 1024 * 1024
    return max(32 * 1024 * 1024, min(96 * 1024 * 1024, cap // 2))


def conv3x3_block(x_nchw, weight, gamma, beta, *, eps=_EPS):
    """Forward of Conv3x3: BN(Conv2d(ReLU(x))) with training-mode batch stats."""
    N, C, H, W = x_nchw.shape
    HW = H * W
    # TODO(synk): stride != 1 not supported (module default stride=1 is implemented).
    # TODO(synk): for realistic H*W on v7x (64 MiB VMEM/TC), add a spatial grid
    # axis with halo rows instead of whole-image blocks so both TCs stay fed.

    x3 = x_nchw.reshape(N, C, HW)                                # free reshape, no transpose
    # (C_out, C_in, 3, 3) -> (C_out, 3, 3, C_in) -> (C_out, 9*C_in): tap-major
    # im2col layout matching the in-kernel window stacking. Tiny, done once.
    w2 = jnp.transpose(weight, (0, 2, 3, 1)).reshape(C, 9 * C).astype(jnp.float32)

    cparams = pltpu.CompilerParams(
        dimension_semantics=("parallel",),
        vmem_limit_bytes=_vmem_limit_bytes(),
    )

    # Pass 1: per-batch-block per-channel partial (sum, centered sum-of-squares).
    stats = pl.pallas_call(
        functools.partial(_conv_stats_kernel, H=H, W=W),
        out_shape=jax.ShapeDtypeStruct((N, 2, C), jnp.float32),
        grid_spec=pltpu.PrefetchScalarGridSpec(
            num_scalar_prefetch=0,
            grid=(N,),
            in_specs=[
                pl.BlockSpec((1, C, HW), lambda n: (n, 0, 0)),
                pl.BlockSpec((C, 9 * C), lambda n: (0, 0)),
            ],
            out_specs=pl.BlockSpec((1, 2, C), lambda n: (n, 0, 0)),
        ),
        compiler_params=cparams,
    )(x3, w2)

    # Fold BN into per-channel scale/shift. Per-block partials are combined with
    # Chan's parallel-variance formula (tiny (N, C)-sized math, plain jnp).
    count = float(HW)
    sums = stats[:, 0, :]                                        # (N, C)
    m2s = stats[:, 1, :]                                         # (N, C)
    mean_b = sums / count                                        # per-block means
    mean = jnp.mean(mean_b, axis=0)                              # (C,)
    m2_tot = jnp.sum(m2s, axis=0) + count * jnp.sum(
        (mean_b - mean[None, :]) ** 2, axis=0)
    var = jnp.maximum(m2_tot / (N * count), 0.0)                 # biased variance
    a = gamma.astype(jnp.float32) * jax.lax.rsqrt(var + eps)
    b = beta.astype(jnp.float32) - mean * a

    # Fold the BN scale into the conv weights (tiny (C, 9C) XLA op, done once);
    # pass 2 then only adds the per-channel shift.
    w2_scaled = w2 * a[:, None]
    b2 = b.reshape(C, 1)

    # Pass 2: recompute ReLU+conv per block and apply y = conv_scaled + b.
    y3 = pl.pallas_call(
        functools.partial(_conv_bn_kernel, H=H, W=W),
        out_shape=jax.ShapeDtypeStruct((N, C, HW), x_nchw.dtype),
        grid_spec=pltpu.PrefetchScalarGridSpec(
            num_scalar_prefetch=0,
            grid=(N,),
            in_specs=[
                pl.BlockSpec((1, C, HW), lambda n: (n, 0, 0)),
                pl.BlockSpec((C, 9 * C), lambda n: (0, 0)),
                pl.BlockSpec((C, 1), lambda n: (0, 0)),
            ],
            out_specs=pl.BlockSpec((1, C, HW), lambda n: (n, 0, 0)),
        ),
        compiler_params=cparams,
    )(x3, w2_scaled, b2)

    return y3.reshape(N, C, H, W)
    # TODO(synk): running_mean/running_var momentum updates (training-time side
    # effect of nn.BatchNorm2d) do not affect the forward output; not modeled.


def _reference(x, weight, gamma, beta, eps=_EPS):
    xr = jnp.maximum(x, 0.0)
    conv = jax.lax.conv_general_dilated(
        xr, weight, window_strides=(1, 1), padding=((1, 1), (1, 1)),
        dimension_numbers=("NCHW", "OIHW", "NCHW"))
    mean = jnp.mean(conv, axis=(0, 2, 3), keepdims=True)
    var = jnp.mean((conv - mean) ** 2, axis=(0, 2, 3), keepdims=True)
    g = gamma.reshape(1, -1, 1, 1)
    b = beta.reshape(1, -1, 1, 1)
    return (conv - mean) * jax.lax.rsqrt(var + eps) * g + b


if __name__ == "__main__":
    key = jax.random.PRNGKey(0)
    N, C, H, W = 2, 4, 16, 16
    kx, kw = jax.random.split(key)

    x = jax.random.normal(kx, (N, C, H, W), dtype=jnp.float32)
    # Conv2d(C, C, 3, bias=False) init: U(-k, k), k = 1/sqrt(C*3*3)
    bound = 1.0 / (C * 9) ** 0.5
    weight = jax.random.uniform(kw, (C, C, 3, 3), jnp.float32, -bound, bound)
    # BatchNorm2d affine params at PyTorch init: weight=1, bias=0
    gamma = jnp.ones((C,), jnp.float32)
    beta = jnp.zeros((C,), jnp.float32)

    y = conv3x3_block(x, weight, gamma, beta)
    y = jax.block_until_ready(y)

    y_ref = _reference(x, weight, gamma, beta)
    assert y.shape == (N, C, H, W)
    assert jnp.allclose(y, y_ref, atol=1e-4, rtol=1e-4), "mismatch vs reference"

    print("KERNEL_OK")
</pallas_src>

<mosaic_0001>
module attributes {stable_mosaic.version = 11 : i64} {
  func.func @_conv_stats_kernel(%arg0: i32, %arg1: memref<1x4x256xf32, #tpu.memory_space<vmem>>, %arg2: memref<4x36xf32, #tpu.memory_space<vmem>>, %arg3: memref<1x2x4xf32, #tpu.memory_space<vmem>>) attributes {dimension_semantics = [#tpu.dimension_semantics<parallel>], iteration_bounds = array<i64: 2>, scalar_prefetch = 0 : i64, scratch_operands = 0 : i64, tpu.core_type = #tpu.core_type<tc>, window_params = [{transform_indices = @transform_0, window_bounds = array<i64: 1, 4, 256>}, {pipeline_mode = #tpu.pipeline_mode<synchronous>, transform_indices = @transform_1, window_bounds = array<i64: 4, 36>}, {transform_indices = @transform_2, window_bounds = array<i64: 1, 2, 4>}]} {
    %c0 = arith.constant 0 : index
    %c0_0 = arith.constant 0 : index
    %c0_1 = arith.constant 0 : index
    %0 = vector.load %arg1[%c0, %c0_0, %c0_1] : memref<1x4x256xf32, #tpu.memory_space<vmem>>, vector<1x4x256xf32>
    %1 = vector.shape_cast %0 : vector<1x4x256xf32> to vector<4x256xf32>
    %cst = arith.constant 0.000000e+00 : f32
    %2 = vector.broadcast %cst : f32 to vector<4x256xf32>
    %3 = arith.maximumf %1, %2 : vector<4x256xf32>
    %4 = tpu.iota {dimensions = array<i32: 1>} : vector<1x256xi32>
    %c16_i32 = arith.constant 16 : i32
    %c0_i32 = arith.constant 0 : i32
    %5 = arith.cmpi eq, %c16_i32, %c0_i32 : i32
    %c1_i32 = arith.constant 1 : i32
    %6 = arith.select %5, %c1_i32, %c16_i32 : i32
    %7 = vector.broadcast %6 : i32 to vector<1x256xi32>
    %8 = arith.remsi %4, %7 : vector<1x256xi32>
    %c0_i32_2 = arith.constant 0 : i32
    %9 = vector.broadcast %c0_i32_2 : i32 to vector<1x256xi32>
    %10 = arith.cmpi ne, %8, %9 : vector<1x256xi32>
    %c0_i32_3 = arith.constant 0 : i32
    %11 = vector.broadcast %c0_i32_3 : i32 to vector<1x256xi32>
    %12 = arith.cmpi slt, %8, %11 : vector<1x256xi32>
    %c0_i32_4 = arith.constant 0 : i32
    %13 = arith.cmpi slt, %6, %c0_i32_4 : i32
    %14 = vector.broadcast %13 : i1 to vector<1x256xi1>
    %15 = vector.broadcast %14 : vector<1x256xi1> to vector<1x256xi1>
    %16 = arith.xori %12, %15 : vector<1x256xi1>
    %17 = arith.andi %16, %10 : vector<1x256xi1>
    %18 = vector.broadcast %6 : i32 to vector<1x256xi32>
    %19 = arith.addi %8, %18 : vector<1x256xi32>
    %20 = arith.select %17, %19, %8 : vector<1x256xi1>, vector<1x256xi32>
    %c15_i32 = arith.constant 15 : i32
    %21 = vector.broadcast %c15_i32 : i32 to vector<1x256xi32>
    %22 = arith.cmpi ne, %20, %21 : vector<1x256xi32>
    %cst_5 = arith.constant 0.000000e+00 : f32
    %23 = vector.shape_cast %22 : vector<1x256xi1> to vector<1x256xi1>
    %24 = vector.broadcast %23 : vector<1x256xi1> to vector<4x256xi1>
    %25 = vector.broadcast %cst_5 : f32 to vector<4x256xf32>
    %26 = arith.select %24, %3, %25 : vector<4x256xi1>, vector<4x256xf32>
    %c0_i32_6 = arith.constant 0 : i32
    %27 = vector.broadcast %c0_i32_6 : i32 to vector<1x256xi32>
    %28 = arith.cmpi ne, %20, %27 : vector<1x256xi32>
    %cst_7 = arith.constant 0.000000e+00 : f32
    %29 = vector.shape_cast %28 : vector<1x256xi1> to vector<1x256xi1>
    %30 = vector.broadcast %29 : vector<1x256xi1> to vector<4x256xi1>
    %31 = vector.broadcast %cst_7 : f32 to vector<4x256xf32>
    %32 = arith.select %30, %3, %31 : vector<4x256xi1>, vector<4x256xf32>
    %cst_8 = arith.constant 0.000000e+00 : f32
    %33 = vector.broadcast %cst_8 : f32 to vector<4x17xf32>
    %34 = tpu.concatenate %33, %26, %33 in 1 : vector<4x17xf32>, vector<4x256xf32>, vector<4x17xf32> -> vector<4x290xf32>
    %35 = tpu.concatenate %33, %3, %33 in 1 : vector<4x17xf32>, vector<4x256xf32>, vector<4x17xf32> -> vector<4x290xf32>
    %36 = tpu.concatenate %33, %32, %33 in 1 : vector<4x17xf32>, vector<4x256xf32>, vector<4x17xf32> -> vector<4x290xf32>
    %37 = vector.extract_strided_slice %34 {offsets = [0, 0], sizes = [4, 256], strides = [1, 1]} : vector<4x290xf32> to vector<4x256xf32>
    %38 = vector.extract_strided_slice %35 {offsets = [0, 1], sizes = [4, 256], strides = [1, 1]} : vector<4x290xf32> to vector<4x256xf32>
    %39 = vector.extract_strided_slice %36 {offsets = [0, 2], sizes = [4, 256], strides = [1, 1]} : vector<4x290xf32> to vector<4x256xf32>
    %40 = vector.extract_strided_slice %34 {offsets = [0, 16], sizes = [4, 256], strides = [1, 1]} : vector<4x290xf32> to vector<4x256xf32>
    %41 = vector.extract_strided_slice %35 {offsets = [0, 17], sizes = [4, 256], strides = [1, 1]} : vector<4x290xf32> to vector<4x256xf32>
    %42 = vector.extract_strided_slice %36 {offsets = [0, 18], sizes = [4, 256], strides = [1, 1]} : vector<4x290xf32> to vector<4x256xf32>
    %43 = vector.extract_strided_slice %34 {offsets = [0, 32], sizes = [4, 256], strides = [1, 1]} : vector<4x290xf32> to vector<4x256xf32>
    %44 = vector.extract_strided_slice %35 {offsets = [0, 33], sizes = [4, 256], strides = [1, 1]} : vector<4x290xf32> to vector<4x256xf32>
    %45 = vector.extract_strided_slice %36 {offsets = [0, 34], sizes = [4, 256], strides = [1, 1]} : vector<4x290xf32> to vector<4x256xf32>
    %46 = tpu.concatenate %37, %38, %39, %40, %41, %42, %43, %44, %45 in 0 : vector<4x256xf32>, vector<4x256xf32>, vector<4x256xf32>, vector<4x256xf32>, vector<4x256xf32>, vector<4x256xf32>, vector<4x256xf32>, vector<4x256xf32>, vector<4x256xf32> -> vector<36x256xf32>
    %c0_9 = arith.constant 0 : index
    %c0_10 = arith.constant 0 : index
    %47 = vector.load %arg2[%c0_9, %c0_10] : memref<4x36xf32, #tpu.memory_space<vmem>>, vector<4x36xf32>
    %cst_11 = arith.constant dense<0.000000e+00> : vector<4x256xf32>
    %48 = tpu.matmul %47, %46, %cst_11 {dimension_numbers = #tpu.dot_dimension_numbers<[1], [0], [0], [1], [0, 0, 1, 1], [], []>} : vector<4x36xf32>, vector<36x256xf32>, vector<4x256xf32> -> vector<4x256xf32>
    %cst_12 = arith.constant dense<0.000000e+00> : vector<4xf32>
    %49 = vector.multi_reduction <add>, %48, %cst_12 [1] : vector<4x256xf32> to vector<4xf32>
    %50 = vector.shape_cast %49 : vector<4xf32> to vector<4x1xf32>
    %cst_13 = arith.constant 3.906250e-03 : f32
    %51 = vector.broadcast %cst_13 : f32 to vector<4x1xf32>
    %52 = arith.mulf %50, %51 : vector<4x1xf32>
    %53 = vector.broadcast %52 : vector<4x1xf32> to vector<4x256xf32>
    %54 = arith.subf %48, %53 : vector<4x256xf32>
    %55 = arith.mulf %54, %54 : vector<4x256xf32>
    %cst_14 = arith.constant dense<0.000000e+00> : vector<4xf32>
    %56 = vector.multi_reduction <add>, %55, %cst_14 [1] : vector<4x256xf32> to vector<4xf32>
    %57 = vector.shape_cast %56 : vector<4xf32> to vector<4x1xf32>
    %58 = tpu.concatenate %50, %57 in 1 : vector<4x1xf32>, vector<4x1xf32> -> vector<4x2xf32>
    %59 = tpu.transpose %58, [1, 0] : vector<4x2xf32> -> vector<2x4xf32>
    %c0_15 = arith.constant 0 : index
    %c0_16 = arith.constant 0 : index
    %c0_17 = arith.constant 0 : index
    %60 = vector.load %arg3[%c0_15, %c0_16, %c0_17] : memref<1x2x4xf32, #tpu.memory_space<vmem>>, vector<1x2x4xf32>
    %61 = vector.shape_cast %60 : vector<1x2x4xf32> to vector<2x4xf32>
    %62 = vector.shape_cast %59 : vector<2x4xf32> to vector<1x2x4xf32>
    tpu.vector_store %arg3[%c0_15, %c0_16, %c0_17], %62 {strides = array<i32>} : memref<1x2x4xf32, #tpu.memory_space<vmem>>, vector<1x2x4xf32>,
    return
  }
  func.func @transform_0(%arg0: i32) -> (i32, i32, i32) {
    %c0_i32 = arith.constant 0 : i32
    %c0_i32_0 = arith.constant 0 : i32
    %c0_i32_1 = arith.constant 0 : i32
    return %arg0, %c0_i32, %c0_i32_0 : i32, i32, i32
  }
  func.func @transform_1(%arg0: i32) -> (i32, i32) {
    %c0_i32 = arith.constant 0 : i32
    %c0_i32_0 = arith.constant 0 : i32
    %c0_i32_1 = arith.constant 0 : i32
    return %c0_i32, %c0_i32_0 : i32, i32
  }
  func.func @transform_2(%arg0: i32) -> (i32, i32, i32) {
    %c0_i32 = arith.constant 0 : i32
    %c0_i32_0 = arith.constant 0 : i32
    %c0_i32_1 = arith.constant 0 : i32
    return %arg0, %c0_i32, %c0_i32_0 : i32, i32, i32
  }
}

</mosaic_0001>

<llo_original>
// kernel: tpu_custom_call.1
$region0: #{tpu_custom_call.1}
  #allocation0 [shape = 'u32[]', space=smem, size = 0x4, offset = 0x4, fixed_abs, tag = 'smem constant byte address 0x4 - core index']
  #allocation1 [shape = 'u32[72,128]{1,0:T(1,128)}', space=vmem, size = 0x9000, scoped, tag = 'internal scratch']
  %s0 = inlined_call_operand.hbm [shape: f32[2,4,256], index: 0, kind: input, shape index: {}]
  %s1 = inlined_call_operand.hbm [shape: f32[4,36], index: 1, kind: input, shape index: {}]
  %s2 = inlined_call_operand.hbm [shape: f32[2,2,4], index: 2, kind: output, shape index: {}]
  %s3 = sld [smem:[#allocation0]]
  $region49: #{tpu_custom_call.1} parent=0
    _
  %s5 = ssub.s32 1, %s3
  %s6 = scalar_select 0, %s5, %s3
  $region1: #{tpu_custom_call.1} parent=0
    #allocation2 [shape = 'u8[8192]{0}', space=vmem, size = 0x2000, scoped, tag = 'input window, operand 0']
    #allocation3 [shape = 's32[2]{0}', space=sflag, size = 0x8, scoped, tag = 'scoped memory for tpu_custom_call.1']
    #allocation4 [shape = 's32[2]{0}', space=sflag, size = 0x8, scoped, tag = 'scoped memory for tpu_custom_call.1']
    #allocation5 [shape = 'u8[2048]{0}', space=vmem, size = 0x800, scoped, tag = 'input window, operand 1, single buffered']
    #allocation6 [shape = 's32[1]{0}', space=sflag, size = 0x4, scoped, tag = 'scoped memory for tpu_custom_call.1']
    #allocation7 [shape = 'u8[2048]{0}', space=vmem, size = 0x800, scoped, tag = 'output window, operand 0']
    %7 = vsyncpa [#allocation3], 0
    %s8 = scalar_lea.sflag [#allocation3], 1
    %9 = vsyncpa %s8, 0
    %10 = vsyncpa [#allocation6], 0
    %11 = vsyncpa [#allocation4], 0
    %s12 = scalar_lea.sflag [#allocation4], 1
    %13 = vsyncpa %s12, 0
    loop: start=0, step=1, limit=4
    $region2: #{tpu_custom_call.1} parent=1 // loop_pre_header
      _
    $region3: #{tpu_custom_call.1} parent=1 // loop_header
      %s15 = sphi 0, %s19
      %p16 = scmp.ge.s32.totalorder %s15, 4
      %s25 = sphi 0, %s27
      %s28 = sphi 0, %s25
      %s29 = sphi 0, %s28
      %s45 = sphi 0, %s29
      %s49 = sphi 0, %s49
      %s51 = sphi 0, %s49
      %s52 = sphi 0, %s51
      %s66 = sphi 0, %s52
      %s72 = sphi 0, %s74
      %s75 = sphi 0, %s72
      %s76 = sphi 0, %s75
      %s92 = sphi 0, %s76
    $region4: #{tpu_custom_call.1} parent=1 // loop_header_branch
      %18 = sbr.rel (%p16) target = $region8
    $region5: #{tpu_custom_call.1} parent=1 // loop_body
      %s20 = ssub.s32 %s15, 1
      %s21 = ssub.s32 %s15, 2
      %s22 = sadd.s32 %s15, 1
      %s23 = ssub.s32 %s15, %s22
      %p24 = scmp.eq.s32.totalorder %s23, 0
      %s26 = sadd.s32 %s25, 1
      %s27 = scalar_select %p24, %s25, %s26
      %p30 = pneg %p24
      %p31 = scmp.eq.s32.totalorder %s15, 1
      %p32 = por %p30, %p31
      %p33 = scmp.ne.s32.totalorder %s25, %s28
      %p34 = scmp.eq.s32.totalorder %s15, 0
      %p35 = por %p33, %p34
      %p36 = scmp.ne.s32.totalorder %s25, %s28
      %p37 = scmp.eq.s32.totalorder %s20, 1
      %p38 = por %p36, %p37
      %p39 = scmp.ne.s32.totalorder %s28, %s29
      %p40 = scmp.eq.s32.totalorder %s20, 0
      %p41 = por %p39, %p40
      %p42 = scmp.ne.s32.totalorder %s28, %s29
      %p43 = scmp.eq.s32.totalorder %s21, 1
      %p44 = por %p42, %p43
      %p46 = scmp.ne.s32.totalorder %s29, %s45
      %p47 = scmp.eq.s32.totalorder %s21, 0
      %p48 = por %p46, %p47
      %s50 = sadd.s32 %s49, 1
      %p53 = scmp.eq.s32.totalorder %s15, 1
      %p54 = scmp.ne.s32.totalorder %s49, %s51
      %p55 = scmp.eq.s32.totalorder %s15, 0
      %p56 = por %p54, %p55
      %p57 = scmp.ne.s32.totalorder %s49, %s51
      %p58 = scmp.eq.s32.totalorder %s20, 1
      %p59 = por %p57, %p58
      %p60 = scmp.ne.s32.totalorder %s51, %s52
      %p61 = scmp.eq.s32.totalorder %s20, 0
      %p62 = por %p60, %p61
      %p63 = scmp.ne.s32.totalorder %s51, %s52
      %p64 = scmp.eq.s32.totalorder %s21, 1
      %p65 = por %p63, %p64
      %p67 = scmp.ne.s32.totalorder %s52, %s66
      %p68 = scmp.eq.s32.totalorder %s21, 0
      %p69 = por %p67, %p68
      %s70 = ssub.s32 %s15, %s22
      %p71 = scmp.eq.s32.totalorder %s70, 0
      %s73 = sadd.s32 %s72, 1
      %s74 = scalar_select %p71, %s72, %s73
      %p77 = pneg %p71
      %p78 = scmp.eq.s32.totalorder %s15, 1
      %p79 = por %p77, %p78
      %p80 = scmp.ne.s32.totalorder %s72, %s75
      %p81 = scmp.eq.s32.totalorder %s15, 0
      %p82 = por %p80, %p81
      %p83 = scmp.ne.s32.totalorder %s72, %s75
      %p84 = scmp.eq.s32.totalorder %s20, 1
      %p85 = por %p83, %p84
      %p86 = scmp.ne.s32.totalorder %s75, %s76
      %p87 = scmp.eq.s32.totalorder %s20, 0
      %p88 = por %p86, %p87
      %p89 = scmp.ne.s32.totalorder %s75, %s76
      %p90 = scmp.eq.s32.totalorder %s21, 1
      %p91 = por %p89, %p90
      %p93 = scmp.ne.s32.totalorder %s76, %s92
      %p94 = scmp.eq.s32.totalorder %s21, 0
      %p95 = por %p93, %p94
      %p96 = scmp.le.s32.totalorder 1, %s15
      %p97 = scmp.lt.s32.totalorder %s15, 3
      %p98 = pnand %p96, %p97
      %p99 = pneg %p98
      // Predicated region
      $region9: #{tpu_custom_call.1} parent=5 // pred_check
        _
      $region10: #{tpu_custom_call.1} parent=5 // pred_check_branch
        %101 = sbr.rel (%p98) target = $region12
      $region11: #{tpu_custom_call.1} parent=5 // pred_region
        %s102 = ssub.s32 %s15, 1
        // Predicated region
        $region13: #{tpu_custom_call.1} parent=11 // pred_check
          %p103 = pneg %p62
        $region14: #{tpu_custom_call.1} parent=11 // pred_check_branch
          %105 = sbr.rel (%p103) target = $region16
        $region15: #{tpu_custom_call.1} parent=11 // pred_region
          %107 = vsyncadd [#allocation6], 0
          %s109 = sshll.u32 %s1, 4
          %s110 = int_to_ptr.hbm [resolvable:$true] %s109
          %s111 = sshll.u32 [#allocation5], 4
          %s112 = int_to_ptr.vmem [resolvable:$true] %s111
          %114 = dma.hbm_to_vmem [thread:$0]  %s110, 64, %s112, [#allocation6]
        $region16: #{tpu_custom_call.1} parent=11 // pred_fallthru
          _
      $region12: #{tpu_custom_call.1} parent=5 // pred_fallthru
        _
      %p115 = scmp.lt.s32.totalorder %s15, 2
      // Predicated region
      $region17: #{tpu_custom_call.1} parent=5 // pred_check
        %p116 = pneg %p115
      $region18: #{tpu_custom_call.1} parent=5 // pred_check_branch
        %118 = sbr.rel (%p116) target = $region20
      $region19: #{tpu_custom_call.1} parent=5 // pred_region
        // Predicated region
        $region21: #{tpu_custom_call.1} parent=19 // pred_check
          %p119 = pneg %p35
        $region22: #{tpu_custom_call.1} parent=19 // pred_check_branch
          %121 = sbr.rel (%p119) target = $region24
        $region23: #{tpu_custom_call.1} parent=19 // pred_region
          %s122 = sand.u32 %s25, 1
          %s123 = scalar_lea.sflag [#allocation3], %s122
          %s124 = sand.u32 %s25, 1
          %s125 = smul.addr %s124, 8
          %s126 = scalar_lea.vmem [#allocation2], %s125
          %128 = vsyncadd %s123, 0
          %s129 = smul.addr %s15, 2
          %s130 = smul.addr %s129, 4
          %s131 = scalar_lea.hbm %s0, %s130
          %s133 = sshll.u32 %s131, 4
          %s134 = int_to_ptr.hbm [resolvable:$true] %s133
          %s135 = sshll.u32 %s126, 4
          %s136 = int_to_ptr.vmem [resolvable:$true] %s135
          %138 = dma.hbm_to_vmem [thread:$0]  %s134, 128, %s136, %s123
        $region24: #{tpu_custom_call.1} parent=19 // pred_fallthru
          _
      $region20: #{tpu_custom_call.1} parent=5 // pred_fallthru
        _
      %p139 = scmp.le.s32.totalorder 1, %s15
      %p140 = scmp.lt.s32.totalorder %s15, 3
      %p141 = pnand %p139, %p140
      %p142 = pneg %p141
      // Predicated region
      $region25: #{tpu_custom_call.1} parent=5 // pred_check
        _
      $region26: #{tpu_custom_call.1} parent=5 // pred_check_branch
        %144 = sbr.rel (%p141) target = $region28
      $region27: #{tpu_custom_call.1} parent=5 // pred_region
        %s145 = ssub.s32 %s15, 1
        %s146 = sand.u32 %s28, 1
        %s147 = scalar_lea.sflag [#allocation3], %s146
        %s148 = sand.u32 %s28, 1
        %s149 = smul.addr %s148, 8
        %s150 = scalar_lea.vmem [#allocation2], %s149
        // Predicated region
        $region29: #{tpu_custom_call.1} parent=27 // pred_check
          %p151 = pneg %p41
        $region30: #{tpu_custom_call.1} parent=27 // pred_check_branch
          %153 = sbr.rel (%p151) target = $region32
        $region31: #{tpu_custom_call.1} parent=27 // pred_region
          %155 = dma.done %s147, 128
        $region32: #{tpu_custom_call.1} parent=27 // pred_fallthru
          _
        // Predicated region
        $region33: #{tpu_custom_call.1} parent=27 // pred_check
          %p156 = pneg %p62
        $region34: #{tpu_custom_call.1} parent=27 // pred_check_branch
          %158 = sbr.rel (%p156) target = $region36
        $region35: #{tpu_custom_call.1} parent=27 // pred_region
          %160 = dma.done [#allocation6], 64
        $region36: #{tpu_custom_call.1} parent=27 // pred_fallthru
          _
        %s161 = sand.u32 %s28, 1
        %s162 = scalar_lea.sflag [#allocation3], %s161
        %s163 = sand.u32 %s28, 1
        %s164 = smul.addr %s163, 8
        %s165 = scalar_lea.vmem [#allocation2], %s164
        %p166 = pneg %p41
        %p167 = pneg %p38
        %p168 = pneg %p62
        %p169 = pneg %p59
        %p170 = pneg %p88
        %p171 = pneg %p85
        %s172 = sand.u32 %s75, 1
        %s173 = scalar_lea.sflag [#allocation4], %s172
        %s174 = sand.u32 %s75, 1
        %s175 = smul.addr %s174, 2
        %s176 = scalar_lea.vmem [#allocation7], %s175
        %v177 = vld [vmem:[%s150] sm:$0xff]
        %v178 = vmax.f32 %v177, 0.0
        %v179 = vlaneseq
        %v180 = vand.u32 %v179, 127
        %v181 = vadd.s32 %v180, 128
        %vm182 = vcmp.lt.s32.totalorder %v180, 0
        %v183 = vsub.s32 0, %v180
        %v184 = vsel %vm182, %v183, %v180
        %v185 = vshrl.u32 %v184, 4
        %v186 = vand.u32 %v184, 15
        %v187 = vsub.s32 0, %v186
        %v188 = vsel %vm182, %v187, %v186
        %vm189 = vcmp.lt.s32.totalorder %v181, 0
        %v190 = vsub.s32 0, %v181
        %v191 = vsel %vm189, %v190, %v181
        %v192 = vshrl.u32 %v191, 4
        %v193 = vand.u32 %v191, 15
        %v194 = vsub.s32 0, %v193
        %v195 = vsel %vm189, %v194, %v193
        %vm196 = vcmp.ne.s32.totalorder %v188, 0
        %vm197 = vcmp.ne.s32.totalorder %v195, 0
        %vm198 = vcmp.lt.s32.totalorder %v188, 0
        %vm199 = vcmp.lt.s32.totalorder %v195, 0
        %vm200 = vmand %vm198, %vm196
        %vm201 = vmand %vm199, %vm197
        %v202 = vadd.s32 %v188, 16
        %v203 = vadd.s32 %v195, 16
        %v204 = vsel %vm200, %v202, %v188
        %v205 = vsel %vm201, %v203, %v195
        %vm206 = vcmp.ne.s32.totalorder %v204, 15
        %vm207 = vcmp.ne.s32.totalorder %v205, 15
        %v208 = vsel %vm206, 1, 0
        %v209 = vsel %vm207, 1, 0
        %vm210 = vcmp.eq.s32.totalorder %v208, 1
        %vm211 = vcmp.eq.s32.totalorder %v209, 1
        %213 = vst [vmem:[#allocation1] ss:$2 sm:$0xff] %v178
        %v214 = vld.sshfl [vmem:[#allocation1] sm:$0xff pattern:$0x75316420]
        %v215 = vld.sshfl [vmem:[#allocation1 + $0x8] sm:$0xff pattern:$0x75316420]
        %v218 = vsel %vm210, %v214, 0.0
        %v219 = vsel %vm211, %v215, 0.0
        %vm220 = vcmp.ne.s32.totalorder %v204, 0
        %vm221 = vcmp.ne.s32.totalorder %v205, 0
        %v222 = vsel %vm220, 1, 0
        %v223 = vsel %vm221, 1, 0
        %vm224 = vcmp.eq.s32.totalorder %v222, 1
        %vm225 = vcmp.eq.s32.totalorder %v223, 1
        %226 = vst [vmem:[#allocation1] ss:$2 sm:$0xff] %v178
        %v227 = vld.sshfl [vmem:[#allocation1] sm:$0xff pattern:$0x75316420]
        %v228 = vld.sshfl [vmem:[#allocation1 + $0x8] sm:$0xff pattern:$0x75316420]
        %v231 = vsel %vm224, %v227, 0.0
        %v232 = vsel %vm225, %v228, 0.0
        %235 = vrot.lane.b32.xlu0 %v218, 17
        %v236 = vpop.permute.xlu0 %235
        %237 = vrot.lane.b32.xlu0 %v219, 17
        %v238 = vpop.permute.xlu0 %237
        %vm239 = vcmask 138240
        %v240 = vsel %vm239, %v236, %v238
        %v244 = vsel %vm239, 0.0, %v236
        %v245 = vsel %vm239, %v238, 0.0
        %246 = vst [vmem:[#allocation1] ss:$2 sm:$0xff] %v178
        %v247 = vld.sshfl [vmem:[#allocation1] sm:$0xff pattern:$0x75316420]
        %v248 = vld.sshfl [vmem:[#allocation1 + $0x8] sm:$0xff pattern:$0x75316420]
        %249 = vrot.lane.b32.xlu0 %v247, 17
        %v250 = vpop.permute.xlu0 %249
        %251 = vrot.lane.b32.xlu0 %v248, 17
        %v252 = vpop.permute.xlu0 %251
        %v253 = vsel %vm239, %v250, %v252
        %v256 = vsel %vm239, 0.0, %v250
        %v257 = vsel %vm239, %v252, 0.0
        %260 = vrot.lane.b32.xlu0 %v231, 17
        %v261 = vpop.permute.xlu0 %260
        %262 = vrot.lane.b32.xlu0 %v232, 17
        %v263 = vpop.permute.xlu0 %262
        %v264 = vsel %vm239, %v261, %v263
        %v267 = vsel %vm239, 0.0, %v261
        %v268 = vsel %vm239, %v263, 0.0
        %v271 = vrot.slane %v256, 4
        %v272 = vrot.slane %v253, 4
        %v273 = vrot.slane %v257, 4
        %274 = vrot.lane.b32.xlu0 %v271, 127
        %v275 = vpop.permute.xlu0 %274
        %276 = vrot.lane.b32.xlu0 %v272, 127
        %v277 = vpop.permute.xlu0 %276
        %278 = vrot.lane.b32.xlu0 %v273, 127
        %v279 = vpop.permute.xlu0 %278
        %vm280 = vcmask 1039360
        %v281 = vsel %vm280, %v275, %v277
        %v282 = vsel %vm280, %v277, %v279
        %287 = vrot.lane.b32.xlu0 %v267, 126
        %v288 = vpop.permute.xlu0 %287
        %289 = vrot.lane.b32.xlu0 %v264, 126
        %v290 = vpop.permute.xlu0 %289
        %291 = vrot.lane.b32.xlu0 %v268, 126
        %v292 = vpop.permute.xlu0 %291
        %vm293 = vcmask 1031168
        %v294 = vsel %vm293, %v288, %v290
        %v295 = vsel %vm293, %v290, %v292
        %v300 = vrot.slane %v244, 4
        %v301 = vrot.slane %v240, 4
        %v302 = vrot.slane %v245, 4
        %303 = vrot.lane.b32.xlu0 %v300, 112
        %v304 = vpop.permute.xlu0 %303
        %305 = vrot.lane.b32.xlu0 %v301, 112
        %v306 = vpop.permute.xlu0 %305
        %307 = vrot.lane.b32.xlu0 %v302, 112
        %v308 = vpop.permute.xlu0 %307
        %vm309 = vcmask 916480
        %v310 = vsel %vm309, %v304, %v306
        %v311 = vsel %vm309, %v306, %v308
        %314 = vrot.lane.b32.xlu0 %v256, 111
        %v315 = vpop.permute.xlu0 %314
        %316 = vrot.lane.b32.xlu0 %v253, 111
        %v317 = vpop.permute.xlu0 %316
        %318 = vrot.lane.b32.xlu0 %v257, 111
        %v319 = vpop.permute.xlu0 %318
        %vm320 = vcmask 908288
        %v321 = vsel %vm320, %v315, %v317
        %v322 = vsel %vm320, %v317, %v319
        %v325 = vrot.slane %v267, 4
        %v326 = vrot.slane %v264, 4
        %v327 = vrot.slane %v268, 4
        %328 = vrot.lane.b32.xlu0 %v325, 110
        %v329 = vpop.permute.xlu0 %328
        %330 = vrot.lane.b32.xlu0 %v326, 110
        %v331 = vpop.permute.xlu0 %330
        %332 = vrot.lane.b32.xlu0 %v327, 110
        %v333 = vpop.permute.xlu0 %332
        %vm334 = vcmask 900096
        %v335 = vsel %vm334, %v329, %v331
        %v336 = vsel %vm334, %v331, %v333
        %339 = vrot.lane.b32.xlu0 %v244, 96
        %v340 = vpop.permute.xlu0 %339
        %341 = vrot.lane.b32.xlu0 %v240, 96
        %v342 = vpop.permute.xlu0 %341
        %343 = vrot.lane.b32.xlu0 %v245, 96
        %v344 = vpop.permute.xlu0 %343
        %vm345 = vcmask 785408
        %v346 = vsel %vm345, %v340, %v342
        %v347 = vsel %vm345, %v342, %v344
        %350 = vrot.lane.b32.xlu0 %v271, 95
        %v351 = vpop.permute.xlu0 %350
        %352 = vrot.lane.b32.xlu0 %v272, 95
        %v353 = vpop.permute.xlu0 %352
        %354 = vrot.lane.b32.xlu0 %v273, 95
        %v355 = vpop.permute.xlu0 %354
        %vm356 = vcmask 777216
        %v357 = vsel %vm356, %v351, %v353
        %v358 = vsel %vm356, %v353, %v355
        %361 = vrot.lane.b32.xlu0 %v267, 94
        %v362 = vpop.permute.xlu0 %361
        %363 = vrot.lane.b32.xlu0 %v264, 94
        %v364 = vpop.permute.xlu0 %363
        %365 = vrot.lane.b32.xlu0 %v268, 94
        %v366 = vpop.permute.xlu0 %365
        %vm367 = vcmask 769024
        %v368 = vsel %vm367, %v362, %v364
        %v369 = vsel %vm367, %v364, %v366
        %vm370 = vcmask 1043456
        %v371 = vsel %vm370, %v244, %v281
        %v372 = vsel %vm370, %v240, %v282
        %v373 = vsel %vm370, %v294, %v310
        %v374 = vsel %vm370, %v295, %v311
        %v375 = vsel %vm370, %v321, %v335
        %v376 = vsel %vm370, %v322, %v336
        %v377 = vsel %vm370, %v346, %v357
        %v378 = vsel %vm370, %v347, %v358
        %v379 = vld [vmem:[#allocation5] sm:$0xf]
        %vm380 = vcmask 293888
        %v382 = vsel %vm380, %v379, 0
        %v384 = vsel %vm370, %v368, 0
        %v386 = vsel %vm370, %v369, 0
        %388 = vmatpush.msra.mxu0 0.0
        %389 = vmatpush.msra.mxu0 0.0
        %390 = vmatpush.msra.mxu0 0.0
        %391 = vmatpush.msra.mxu0 0.0
        %392 = vmatpush.msra.mxu0 0.0
        %393 = vmatpush.msra.mxu0 0.0
        %394 = vmatpush.msra.mxu0 0.0
        %395 = vmatpush.msra.mxu0 0.0
        %396 = vmatpush.msra.mxu0 0.0
        %397 = vmatpush.msra.mxu0 0.0
        %398 = vmatpush.msra.mxu0 0.0
        %399 = vmatpush.msra.mxu0 %v384
        %400 = vmatpush.msra.mxu0 %v377
        %401 = vmatpush.msra.mxu0 %v375
        %402 = vmatpush.msra.mxu0 %v373
        %403 = vmatpush.msra.mxu0 %v371
        %404 = vmatmul.f32.gmra.mxu0 %v382
        %v405 = vpop.f32.mrf.mxu0
        %v406 = vadd.f32 0.0, %v405
        %407 = vdwg.mxu0
        %408 = vmatpush.msra.mxu0 0.0
        %409 = vmatpush.msra.mxu0 0.0
        %410 = vmatpush.msra.mxu0 0.0
        %411 = vmatpush.msra.mxu0 0.0
        %412 = vmatpush.msra.mxu0 0.0
        %413 = vmatpush.msra.mxu0 0.0
        %414 = vmatpush.msra.mxu0 0.0
        %415 = vmatpush.msra.mxu0 0.0
        %416 = vmatpush.msra.mxu0 0.0
        %417 = vmatpush.msra.mxu0 0.0
        %418 = vmatpush.msra.mxu0 0.0
        %419 = vmatpush.msra.mxu0 %v386
        %420 = vmatpush.msra.mxu0 %v378
        %421 = vmatpush.msra.mxu0 %v376
        %422 = vmatpush.msra.mxu0 %v374
        %423 = vmatpush.msra.mxu0 %v372
        %424 = vmatmul.f32.gmra.mxu0 %v382
        %v425 = vpop.f32.mrf.mxu0
        %v426 = vadd.f32 0.0, %v425
        %427 = vdwg.mxu0
        %v428 = vsel %vm370, %v406, 0.0
        %v429 = vsel %vm370, %v426, 0.0
        %v430 = vadd.f32 %v428, %v429
        %431 = vadd.xlane.f32.xlu0 %v430
        %v432 = vpop.xlane.xlu0 %431
        %v433 = vmul.f32 %v432, 0.00390625
        %v434 = vsub.f32 %v406, %v433
        %v435 = vsub.f32 %v426, %v433
        %v436 = vmul.f32 %v434, %v434
        %v437 = vmul.f32 %v435, %v435
        %v438 = vsel %vm370, %v436, 0.0
        %v439 = vsel %vm370, %v437, 0.0
        %v440 = vadd.f32 %v438, %v439
        %441 = vadd.xlane.f32.xlu0 %v440
        %v442 = vpop.xlane.xlu0 %441
        %vm443 = vcmask 7168
        %v444 = vsel %vm443, %v432, %v442
        %445 = vxpose.xlu0.b32.start [1/16] %v444, 128
        %446 = vxpose.xlu0.b32.cont [2/16] 0.0, 128
        %447 = vxpose.xlu0.b32.cont [3/16] 0.0, 128
        %448 = vxpose.xlu0.b32.cont [4/16] 0.0, 128
        %449 = vxpose.xlu0.b32.cont [5/16] 0.0, 128
        %450 = vxpose.xlu0.b32.cont [6/16] 0.0, 128
        %451 = vxpose.xlu0.b32.cont [7/16] 0.0, 128
        %452 = vxpose.xlu0.b32.cont [8/16] 0.0, 128
        %453 = vxpose.xlu0.b32.cont [9/16] 0.0, 128
        %454 = vxpose.xlu0.b32.cont [10/16] 0.0, 128
        %455 = vxpose.xlu0.b32.cont [11/16] 0.0, 128
        %456 = vxpose.xlu0.b32.cont [12/16] 0.0, 128
        %457 = vxpose.xlu0.b32.cont [13/16] 0.0, 128
        %458 = vxpose.xlu0.b32.cont [14/16] 0.0, 128
        %459 = vxpose.xlu0.b32.cont [15/16] 0.0, 128
        %460 = vxpose.xlu0.b32.end [16/16] 0.0, 128
        %v461 = vpop.trf.xlu0
        %v462 = vpop.trf.xlu0
        %v463 = vpop.trf.xlu0
        %v464 = vpop.trf.xlu0
        %v465 = vpop.trf.xlu0
        %v466 = vpop.trf.xlu0
        %v467 = vpop.trf.xlu0
        %v468 = vpop.trf.xlu0
        %v469 = vpop.trf.xlu0
        %v470 = vpop.trf.xlu0
        %v471 = vpop.trf.xlu0
        %v472 = vpop.trf.xlu0
        %v473 = vpop.trf.xlu0
        %v474 = vpop.trf.xlu0
        %v475 = vpop.trf.xlu0
        %v476 = vpop.trf.xlu0
        %vm477 = vcmask 25600
        %478 = vst.msk [vmem:[%s176] sm:$0x3] %vm477, %v461
        %s479 = sand.u32 %s75, 1
        %s480 = scalar_lea.sflag [#allocation4], %s479
        %s481 = sand.u32 %s75, 1
        %s482 = smul.addr %s481, 2
        %s483 = scalar_lea.vmem [#allocation7], %s482
        // Predicated region
        $region37: #{tpu_custom_call.1} parent=27 // pred_check
          %p484 = pneg %p85
        $region38: #{tpu_custom_call.1} parent=27 // pred_check_branch
          %486 = sbr.rel (%p484) target = $region40
        $region39: #{tpu_custom_call.1} parent=27 // pred_region
          %488 = vsyncadd %s480, 0
          %s489 = smul.addr %s20, 2
          %s490 = scalar_lea.hbm %s2, %s489
          %s492 = sshll.u32 %s483, 4
          %s493 = int_to_ptr.vmem [resolvable:$true] %s492
          %s494 = sshll.u32 %s490, 4
          %s495 = int_to_ptr.hbm [resolvable:$true] %s494
          %497 = dma.vmem_to_hbm [thread:$0]  %s493, 32, %s495, %s480
        $region40: #{tpu_custom_call.1} parent=27 // pred_fallthru
          _
      $region28: #{tpu_custom_call.1} parent=5 // pred_fallthru
        _
      %p498 = scmp.le.s32.totalorder 2, %s15
      // Predicated region
      $region41: #{tpu_custom_call.1} parent=5 // pred_check
        %p499 = pneg %p498
      $region42: #{tpu_custom_call.1} parent=5 // pred_check_branch
        %501 = sbr.rel (%p499) target = $region44
      $region43: #{tpu_custom_call.1} parent=5 // pred_region
        %s502 = ssub.s32 %s15, 2
        // Predicated region
        $region45: #{tpu_custom_call.1} parent=43 // pred_check
          %p503 = pneg %p91
        $region46: #{tpu_custom_call.1} parent=43 // pred_check_branch
          %505 = sbr.rel (%p503) target = $region48
        $region47: #{tpu_custom_call.1} parent=43 // pred_region
          %s506 = sand.u32 %s76, 1
          %s507 = scalar_lea.sflag [#allocation4], %s506
          %s508 = sand.u32 %s76, 1
          %s509 = smul.addr %s508, 2
          %s510 = scalar_lea.vmem [#allocation7], %s509
          %512 = dma.done %s507, 32
        $region48: #{tpu_custom_call.1} parent=43 // pred_fallthru
          _
      $region44: #{tpu_custom_call.1} parent=5 // pred_fallthru
        _
    $region6: #{tpu_custom_call.1} parent=1 // loop_footer
      %s19 = sadd.s32 1, %s15
    $region7: #{tpu_custom_call.1} parent=1 // loop_footer_branch
      %14 = sbr.rel target = $region3
    $region8: #{tpu_custom_call.1} parent=1 // loop_exit
      _
    %513 = vsyncpa [#allocation3], 1
    %s514 = scalar_lea.sflag [#allocation3], 1
    %515 = vsyncpa %s514, 1
    %516 = vsyncpa [#allocation6], 1
    %517 = vsyncpa [#allocation4], 1
    %s518 = scalar_lea.sflag [#allocation4], 1
    %519 = vsyncpa %s518, 1

</llo_original>
